<compile_context>
chip_gen: v7x
topology: tpu7x:2x2x1
jax: 0.10.0
libtpu: 0.0.40
codegen_flags: <defaults>
</compile_context>

<pallas_src>
import jax
import jax.numpy as jnp
import numpy as np
from jax import lax
from jax.experimental import pallas as pl
from jax.experimental.pallas import tpu as pltpu

BN_EPS = 1e-5                                        # nn.BatchNorm1d default eps
LN_EPS = 1e-5                                        # nn.LayerNorm default eps
BN_SCALE = float(1.0 / np.sqrt(1.0 + BN_EPS))        # eval BN: (x - 0) / sqrt(1 + eps)


def _dot_bf16(a_f32, w_ref):
    """MXU matmul: activations cast to bf16 at the dot, +/-1 bf16 weights
    (layout (in, out)), f32 accumulation."""
    return lax.dot_general(
        a_f32.astype(jnp.bfloat16), w_ref[...],
        (((1,), (0,)), ((), ())),
        preferred_element_type=jnp.float32)


def efficient_ids_kernel(
    x_ref, h_ref,
    w0_ref, b0_ref,              # feature layer 0:   (F, H), (1, H)
    w1_ref, b1_ref,              # feature layer 1:   (H, H), (1, H)
    wg_ref, bg_ref,              # fused GRU weight:  (2H, 3H) = [upd | rst | cand_x(0 h-rows)], (1, 3H)
    whh_ref,                     # candidate h-part:  (H, H)
    wc_ref, bc_ref,              # classifier row (1, H) with BN scale folded, bias (1, 1)
    logits_ref, hnew_ref,
):
    s = BN_SCALE
    s2 = BN_SCALE * BN_SCALE
    H = hnew_ref.shape[-1]

    x = x_ref[...]
    h = h_ref[...]

    # Feature layer 0: eval-BN scale -> ternary matmul -> bias -> ReLU.
    y = jnp.maximum(_dot_bf16(x * s, w0_ref) + b0_ref[...], 0.0)
    # Feature layer 1 (layer-0 post-BN scale folded with layer-1 input BN).
    y = jnp.maximum(_dot_bf16(y * s2, w1_ref) + b1_ref[...], 0.0)

    # MatMulFreeGRU.  comb = [y_scaled | h_scaled]; ONE fused MXU dot yields the
    # update gate, reset gate and the x-side candidate pre-activation.
    hs = h * s                                        # gate input BN on the h half
    comb = jnp.concatenate([y * s2, hs], axis=-1)     # (tb, 2H)
    g = _dot_bf16(comb, wg_ref) + bg_ref[...]         # (tb, 3H)

    zr = jax.nn.sigmoid(g[:, :2 * H])
    update = zr[:, :H]
    reset = zr[:, H:]
    # Candidate: x-part (with bh already folded into bg) + reset-gated h-part.
    cand = jnp.tanh(g[:, 2 * H:] + _dot_bf16(reset * hs, whh_ref))

    h_new = (1.0 - update) * h + update * cand
    # LayerNorm over the hidden dim (gamma=1, beta=0).  NOTE: padded batch rows
    # can hit var ~ 0 here; rsqrt(eps) * 0 stays finite and those rows are
    # sliced off in the wrapper, so this is benign — do not "fix" it.
    mu = jnp.mean(h_new, axis=-1, keepdims=True)
    var = jnp.mean(jnp.square(h_new - mu), axis=-1, keepdims=True)
    h_new = (h_new - mu) * lax.rsqrt(var + LN_EPS)
    hnew_ref[...] = h_new

    # Classifier (out_features = 1): f32 lane reduction on the VPU/XLU instead
    # of an N=1 MXU pass.  The eval-BN scale is already folded into wc_ref.
    logits_ref[...] = (jnp.sum(h_new * wc_ref[...], axis=-1, keepdims=True)
                       + bc_ref[...])


def _ternarize_t(w, alpha):
    """W_t = where(W - alpha > 0, +1, -1) (the 0 branch of the original nested
    torch.where is unreachable), transposed to (in, out)."""
    return jnp.where(w - alpha[None, :] > 0.0, 1.0, -1.0).astype(jnp.float32).T


def _prepare_weights(params, hidden):
    """Hoist all static weight work out of the kernel (done once per call)."""
    (w0, a0, b0), (w1, a1, b1), (wu, au, bu), (wr, ar, br), \
        (wh, ah, bh), (wc, ac, bc) = params
    H = hidden

    w0_t = _ternarize_t(w0, a0).astype(jnp.bfloat16)                # (F, H)
    w1_t = _ternarize_t(w1, a1).astype(jnp.bfloat16)                # (H, H)
    wu_t = _ternarize_t(wu, au)                                     # (2H, H)
    wr_t = _ternarize_t(wr, ar)                                     # (2H, H)
    wh_t = _ternarize_t(wh, ah)                                     # (2H, H)

    # Fused GRU weight (2H, 3H): columns = [update | reset | candidate_x].
    # The candidate's h contribution uses reset*h, so its h-rows here are zero
    # and it gets a separate (H, H) dot (whh) after the reset gate is known.
    zeros_h = jnp.zeros((H, H), jnp.float32)
    wg = jnp.concatenate(
        [jnp.concatenate([wu_t[:H], wr_t[:H], wh_t[:H]], axis=1),    # x rows (H, 3H)
         jnp.concatenate([wu_t[H:], wr_t[H:], zeros_h], axis=1)],    # h rows (H, 3H)
        axis=0).astype(jnp.bfloat16)                                 # (2H, 3H)
    bg = jnp.concatenate([bu, br, bh]).reshape(1, -1).astype(jnp.float32)  # (1, 3H)
    whh = wh_t[H:].astype(jnp.bfloat16)                              # (H, H)

    # Classifier stays on the f32 VPU path; fold its eval-BN scale in.
    wc_row = (_ternarize_t(wc, ac).T * BN_SCALE).astype(jnp.float32)  # (1, H)
    bc_2d = bc.reshape(1, 1).astype(jnp.float32)

    return [w0_t, b0.reshape(1, -1).astype(jnp.float32),
            w1_t, b1.reshape(1, -1).astype(jnp.float32),
            wg, bg, whh,
            wc_row, bc_2d]


def _pick_batch_tiling(B, tile_b):
    """Batch tile: multiple of 8 sublanes; >= 2 grid steps once the batch is
    large enough so the 'parallel' axis shards across v7x's two TensorCores."""
    b8 = ((B + 7) // 8) * 8
    n_steps = max(1, -(-b8 // tile_b))
    if n_steps == 1 and b8 >= 512:
        n_steps = 2
    tb = ((-(-b8 // n_steps)) + 7) // 8 * 8
    return tb, tb * n_steps, n_steps


def efficient_ids_forward(x, h, params, *, tile_b=1024):
    """params: six (W, alpha, bias) tuples: feature0, feature1, update_gate,
    reset_gate, hidden_transform, classifier."""
    B, F = x.shape
    H = h.shape[1]

    weights = _prepare_weights(params, H)

    tb, b_pad, n_steps = _pick_batch_tiling(B, tile_b)
    if b_pad != B:
        x = jnp.pad(x, ((0, b_pad - B), (0, 0)))
        h = jnp.pad(h, ((0, b_pad - B), (0, 0)))

    batch_in_specs = [
        pl.BlockSpec((tb, F), lambda i: (i, 0)),
        pl.BlockSpec((tb, H), lambda i: (i, 0)),
    ]
    # Weights/biases: full-array blocks with a constant index_map -> DMA'd once,
    # resident in VMEM across the whole batch grid.
    weight_specs = [pl.BlockSpec(w.shape, lambda i: (0, 0)) for w in weights]

    # Explicit VMEM budget: double-buffered activation/output tiles + resident
    # weights, with headroom; capped at 64 MiB so a tile tuned on 128 MiB parts
    # cannot silently overshoot v7x.
    act_bytes = 4 * tb * (F + H)
    out_bytes = 4 * tb * (H + 1)
    w_bytes = sum(int(np.prod(w.shape)) * w.dtype.itemsize for w in weights)
    vmem_need = 2 * (act_bytes + out_bytes) + 2 * w_bytes
    vmem_limit = int(min(64 * 1024 * 1024, max(16 * 1024 * 1024, 4 * vmem_need)))

    # Advisory cost estimate so XLA schedules/overlaps the call sensibly.
    flops_per_row = 2 * (F * H + H * H + (2 * H) * (3 * H) + H * H) + 2 * H
    transc_per_row = 3 * H + 1
    cost = pl.CostEstimate(
        flops=int(b_pad * flops_per_row),
        transcendentals=int(b_pad * transc_per_row),
        bytes_accessed=int(b_pad * 4 * (F + 2 * H + 1) + w_bytes))

    logits, h_new = pl.pallas_call(
        efficient_ids_kernel,
        out_shape=(jax.ShapeDtypeStruct((b_pad, 1), jnp.float32),
                   jax.ShapeDtypeStruct((b_pad, H), jnp.float32)),
        grid=(n_steps,),
        in_specs=batch_in_specs + weight_specs,
        out_specs=(pl.BlockSpec((tb, 1), lambda i: (i, 0)),
                   pl.BlockSpec((tb, H), lambda i: (i, 0))),
        compiler_params=pltpu.CompilerParams(
            dimension_semantics=("parallel",),
            vmem_limit_bytes=vmem_limit),
        cost_estimate=cost,
    )(x, h, *weights)
    return logits[:B], h_new[:B]


def init_ternary_linear(key, in_features, out_features):
    """Deterministic init matching kaiming_uniform_(a=sqrt(5)) bounds."""
    kw, kb = jax.random.split(key)
    bound = 1.0 / np.sqrt(in_features)
    w = jax.random.uniform(kw, (out_features, in_features), jnp.float32,
                           minval=-bound, maxval=bound)
    b = jax.random.uniform(kb, (out_features,), jnp.float32,
                           minval=-bound, maxval=bound)
    alpha = jnp.sum(w, axis=0)   # sum(weight) * 1/(n*m), n = m = 1
    return (w, alpha, b)


def _reference_forward(x, h, params):
    """Pure-JAX reference: eval-mode forward of the PyTorch module with the same
    bf16 MXU feeds as the kernel (+/-1 ternary weights are exact in bf16), but
    structurally unfused: lane-axis concats, separate update/reset gate dots."""
    s, s2 = BN_SCALE, BN_SCALE * BN_SCALE

    def tern(w, a):
        return jnp.where(w - a[None, :] > 0.0, 1.0, -1.0)

    def tl(x_scaled, w, a, b):   # caller applies the eval-BN scale
        wt = tern(w, a).astype(jnp.bfloat16)
        out = lax.dot_general(x_scaled.astype(jnp.bfloat16), wt,
                              (((1,), (1,)), ((), ())),
                              preferred_element_type=jnp.float32)
        return out + b[None, :]

    (w0, a0, b0), (w1, a1, b1), (wu, au, bu), (wr, ar, br), \
        (wh, ah, bh), (wc, ac, bc) = params

    y = jnp.maximum(tl(x * s, w0, a0, b0), 0.0)
    y = jnp.maximum(tl(y * s2, w1, a1, b1), 0.0)

    ys, hs = y * s2, h * s
    comb = jnp.concatenate([ys, hs], axis=1)
    upd = jax.nn.sigmoid(tl(comb, wu, au, bu))
    rst = jax.nn.sigmoid(tl(comb, wr, ar, br))
    comb_r = jnp.concatenate([ys, rst * hs], axis=1)
    cand = jnp.tanh(tl(comb_r, wh, ah, bh))

    h_new = (1.0 - upd) * h + upd * cand
    mu = h_new.mean(-1, keepdims=True)
    var = ((h_new - mu) ** 2).mean(-1, keepdims=True)
    h_new = (h_new - mu) / jnp.sqrt(var + LN_EPS)

    # Classifier: f32 elementwise reduction, mirroring the kernel's VPU path.
    wct = tern(wc, ac)                                   # (1, H)
    logits = jnp.sum((h_new * s) * wct, axis=-1, keepdims=True) + bc[None, :]
    return logits, h_new


if __name__ == "__main__":
    B, NUM_FEATURES, HIDDEN = 8, 16, 32

    root = jax.random.PRNGKey(0)
    kx, k0, k1, ku, kr, kt, kc = jax.random.split(root, 7)

    x = jax.random.normal(kx, (B, NUM_FEATURES), jnp.float32)
    h = jnp.zeros((B, HIDDEN), jnp.float32)   # GRU default initial state

    params = [
        init_ternary_linear(k0, NUM_FEATURES, HIDDEN),        # feature layer 0
        init_ternary_linear(k1, HIDDEN, HIDDEN),              # feature layer 1
        init_ternary_linear(ku, HIDDEN + HIDDEN, HIDDEN),     # GRU update gate
        init_ternary_linear(kr, HIDDEN + HIDDEN, HIDDEN),     # GRU reset gate
        init_ternary_linear(kt, HIDDEN + HIDDEN, HIDDEN),     # GRU hidden transform
        init_ternary_linear(kc, HIDDEN, 1),                   # classifier
    ]

    logits, h_new = efficient_ids_forward(x, h, params)
    jax.block_until_ready((logits, h_new))

    ref_logits, ref_h = _reference_forward(x, h, params)
    np.testing.assert_allclose(np.asarray(logits), np.asarray(ref_logits),
                               rtol=1e-3, atol=1e-3)
    np.testing.assert_allclose(np.asarray(h_new), np.asarray(ref_h),
                               rtol=1e-3, atol=1e-3)

    print("KERNEL_OK")
</pallas_src>

<mosaic_0001>
module attributes {stable_mosaic.version = 11 : i64} {
  func.func @efficient_ids_kernel(%arg0: i32, %arg1: memref<8x16xf32, #tpu.memory_space<vmem>>, %arg2: memref<8x32xf32, #tpu.memory_space<vmem>>, %arg3: memref<16x32xbf16, #tpu.memory_space<vmem>>, %arg4: memref<1x32xf32, #tpu.memory_space<vmem>>, %arg5: memref<32x32xbf16, #tpu.memory_space<vmem>>, %arg6: memref<1x32xf32, #tpu.memory_space<vmem>>, %arg7: memref<64x96xbf16, #tpu.memory_space<vmem>>, %arg8: memref<1x96xf32, #tpu.memory_space<vmem>>, %arg9: memref<32x32xbf16, #tpu.memory_space<vmem>>, %arg10: memref<1x32xf32, #tpu.memory_space<vmem>>, %arg11: memref<1x1xf32, #tpu.memory_space<vmem>>, %arg12: memref<8x1xf32, #tpu.memory_space<vmem>>, %arg13: memref<8x32xf32, #tpu.memory_space<vmem>>) attributes {dimension_semantics = [#tpu.dimension_semantics<parallel>], iteration_bounds = array<i64: 1>, scalar_prefetch = 0 : i64, scratch_operands = 0 : i64, tpu.core_type = #tpu.core_type<tc>, window_params = [{transform_indices = @transform_0, window_bounds = array<i64: 8, 16>}, {transform_indices = @transform_1, window_bounds = array<i64: 8, 32>}, {pipeline_mode = #tpu.pipeline_mode<synchronous>, transform_indices = @transform_2, window_bounds = array<i64: 16, 32>}, {pipeline_mode = #tpu.pipeline_mode<synchronous>, transform_indices = @transform_3, window_bounds = array<i64: 1, 32>}, {pipeline_mode = #tpu.pipeline_mode<synchronous>, transform_indices = @transform_4, window_bounds = array<i64: 32, 32>}, {pipeline_mode = #tpu.pipeline_mode<synchronous>, transform_indices = @transform_5, window_bounds = array<i64: 1, 32>}, {pipeline_mode = #tpu.pipeline_mode<synchronous>, transform_indices = @transform_6, window_bounds = array<i64: 64, 96>}, {pipeline_mode = #tpu.pipeline_mode<synchronous>, transform_indices = @transform_7, window_bounds = array<i64: 1, 96>}, {pipeline_mode = #tpu.pipeline_mode<synchronous>, transform_indices = @transform_8, window_bounds = array<i64: 32, 32>}, {pipeline_mode = #tpu.pipeline_mode<synchronous>, transform_indices = @transform_9, window_bounds = array<i64: 1, 32>}, {pipeline_mode = #tpu.pipeline_mode<synchronous>, transform_indices = @transform_10, window_bounds = array<i64: 1, 1>}, {transform_indices = @transform_11, window_bounds = array<i64: 8, 1>}, {transform_indices = @transform_12, window_bounds = array<i64: 8, 32>}]} {
    %c0 = arith.constant 0 : index
    %c0_0 = arith.constant 0 : index
    %0 = vector.load %arg1[%c0, %c0_0] : memref<8x16xf32, #tpu.memory_space<vmem>>, vector<8x16xf32>
    %c0_1 = arith.constant 0 : index
    %c0_2 = arith.constant 0 : index
    %1 = vector.load %arg2[%c0_1, %c0_2] : memref<8x32xf32, #tpu.memory_space<vmem>>, vector<8x32xf32>
    %cst = arith.constant 0.999994993 : f32
    %2 = vector.broadcast %cst : f32 to vector<8x16xf32>
    %3 = arith.mulf %0, %2 : vector<8x16xf32>
    %4 = arith.truncf %3 : vector<8x16xf32> to vector<8x16xbf16>
    %c0_3 = arith.constant 0 : index
    %c0_4 = arith.constant 0 : index
    %5 = vector.load %arg3[%c0_3, %c0_4] : memref<16x32xbf16, #tpu.memory_space<vmem>>, vector<16x32xbf16>
    %cst_5 = arith.constant dense<0.000000e+00> : vector<8x32xf32>
    %6 = tpu.matmul %4, %5, %cst_5 {dimension_numbers = #tpu.dot_dimension_numbers<[1], [0], [0], [1], [0, 0, 1, 1], [], []>} : vector<8x16xbf16>, vector<16x32xbf16>, vector<8x32xf32> -> vector<8x32xf32>
    %c0_6 = arith.constant 0 : index
    %c0_7 = arith.constant 0 : index
    %7 = vector.load %arg4[%c0_6, %c0_7] : memref<1x32xf32, #tpu.memory_space<vmem>>, vector<1x32xf32>
    %8 = vector.broadcast %7 : vector<1x32xf32> to vector<8x32xf32>
    %9 = arith.addf %6, %8 : vector<8x32xf32>
    %cst_8 = arith.constant 0.000000e+00 : f32
    %10 = vector.broadcast %cst_8 : f32 to vector<8x32xf32>
    %11 = arith.maximumf %9, %10 : vector<8x32xf32>
    %cst_9 = arith.constant 0.999989986 : f32
    %12 = vector.broadcast %cst_9 : f32 to vector<8x32xf32>
    %13 = arith.mulf %11, %12 : vector<8x32xf32>
    %14 = arith.truncf %13 : vector<8x32xf32> to vector<8x32xbf16>
    %c0_10 = arith.constant 0 : index
    %c0_11 = arith.constant 0 : index
    %15 = vector.load %arg5[%c0_10, %c0_11] : memref<32x32xbf16, #tpu.memory_space<vmem>>, vector<32x32xbf16>
    %cst_12 = arith.constant dense<0.000000e+00> : vector<8x32xf32>
    %16 = tpu.matmul %14, %15, %cst_12 {dimension_numbers = #tpu.dot_dimension_numbers<[1], [0], [0], [1], [0, 0, 1, 1], [], []>} : vector<8x32xbf16>, vector<32x32xbf16>, vector<8x32xf32> -> vector<8x32xf32>
    %c0_13 = arith.constant 0 : index
    %c0_14 = arith.constant 0 : index
    %17 = vector.load %arg6[%c0_13, %c0_14] : memref<1x32xf32, #tpu.memory_space<vmem>>, vector<1x32xf32>
    %18 = vector.broadcast %17 : vector<1x32xf32> to vector<8x32xf32>
    %19 = arith.addf %16, %18 : vector<8x32xf32>
    %cst_15 = arith.constant 0.000000e+00 : f32
    %20 = vector.broadcast %cst_15 : f32 to vector<8x32xf32>
    %21 = arith.maximumf %19, %20 : vector<8x32xf32>
    %cst_16 = arith.constant 0.999994993 : f32
    %22 = vector.broadcast %cst_16 : f32 to vector<8x32xf32>
    %23 = arith.mulf %1, %22 : vector<8x32xf32>
    %cst_17 = arith.constant 0.999989986 : f32
    %24 = vector.broadcast %cst_17 : f32 to vector<8x32xf32>
    %25 = arith.mulf %21, %24 : vector<8x32xf32>
    %26 = tpu.concatenate %25, %23 in 1 : vector<8x32xf32>, vector<8x32xf32> -> vector<8x64xf32>
    %27 = arith.truncf %26 : vector<8x64xf32> to vector<8x64xbf16>
    %c0_18 = arith.constant 0 : index
    %c0_19 = arith.constant 0 : index
    %28 = vector.load %arg7[%c0_18, %c0_19] : memref<64x96xbf16, #tpu.memory_space<vmem>>, vector<64x96xbf16>
    %cst_20 = arith.constant dense<0.000000e+00> : vector<8x96xf32>
    %29 = tpu.matmul %27, %28, %cst_20 {dimension_numbers = #tpu.dot_dimension_numbers<[1], [0], [0], [1], [0, 0, 1, 1], [], []>} : vector<8x64xbf16>, vector<64x96xbf16>, vector<8x96xf32> -> vector<8x96xf32>
    %c0_21 = arith.constant 0 : index
    %c0_22 = arith.constant 0 : index
    %30 = vector.load %arg8[%c0_21, %c0_22] : memref<1x96xf32, #tpu.memory_space<vmem>>, vector<1x96xf32>
    %31 = vector.broadcast %30 : vector<1x96xf32> to vector<8x96xf32>
    %32 = arith.addf %29, %31 : vector<8x96xf32>
    %33 = vector.extract_strided_slice %32 {offsets = [0, 0], sizes = [8, 64], strides = [1, 1]} : vector<8x96xf32> to vector<8x64xf32>
    %34 = arith.negf %33 : vector<8x64xf32>
    %35 = math.exp %34 : vector<8x64xf32>
    %cst_23 = arith.constant 1.000000e+00 : f32
    %36 = vector.broadcast %cst_23 : f32 to vector<8x64xf32>
    %37 = arith.addf %36, %35 : vector<8x64xf32>
    %38 = arith.divf %36, %37 : vector<8x64xf32>
    %39 = vector.extract_strided_slice %38 {offsets = [0, 0], sizes = [8, 32], strides = [1, 1]} : vector<8x64xf32> to vector<8x32xf32>
    %40 = vector.extract_strided_slice %38 {offsets = [0, 32], sizes = [8, 32], strides = [1, 1]} : vector<8x64xf32> to vector<8x32xf32>
    %41 = vector.extract_strided_slice %32 {offsets = [0, 64], sizes = [8, 32], strides = [1, 1]} : vector<8x96xf32> to vector<8x32xf32>
    %42 = arith.mulf %40, %23 : vector<8x32xf32>
    %43 = arith.truncf %42 : vector<8x32xf32> to vector<8x32xbf16>
    %c0_24 = arith.constant 0 : index
    %c0_25 = arith.constant 0 : index
    %44 = vector.load %arg9[%c0_24, %c0_25] : memref<32x32xbf16, #tpu.memory_space<vmem>>, vector<32x32xbf16>
    %cst_26 = arith.constant dense<0.000000e+00> : vector<8x32xf32>
    %45 = tpu.matmul %43, %44, %cst_26 {dimension_numbers = #tpu.dot_dimension_numbers<[1], [0], [0], [1], [0, 0, 1, 1], [], []>} : vector<8x32xbf16>, vector<32x32xbf16>, vector<8x32xf32> -> vector<8x32xf32>
    %46 = arith.addf %41, %45 : vector<8x32xf32>
    %47 = math.tanh %46 : vector<8x32xf32>
    %cst_27 = arith.constant 1.000000e+00 : f32
    %48 = vector.broadcast %cst_27 : f32 to vector<8x32xf32>
    %49 = arith.subf %48, %39 : vector<8x32xf32>
    %50 = arith.mulf %49, %1 : vector<8x32xf32>
    %51 = arith.mulf %39, %47 : vector<8x32xf32>
    %52 = arith.addf %50, %51 : vector<8x32xf32>
    %cst_28 = arith.constant dense<0.000000e+00> : vector<8xf32>
    %53 = vector.multi_reduction <add>, %52, %cst_28 [1] : vector<8x32xf32> to vector<8xf32>
    %54 = vector.shape_cast %53 : vector<8xf32> to vector<8x1xf32>
    %cst_29 = arith.constant 3.200000e+01 : f32
    %55 = vector.broadcast %cst_29 : f32 to vector<8x1xf32>
    %56 = arith.divf %54, %55 : vector<8x1xf32>
    %57 = vector.broadcast %56 : vector<8x1xf32> to vector<8x32xf32>
    %58 = arith.subf %52, %57 : vector<8x32xf32>
    %59 = arith.mulf %58, %58 : vector<8x32xf32>
    %cst_30 = arith.constant dense<0.000000e+00> : vector<8xf32>
    %60 = vector.multi_reduction <add>, %59, %cst_30 [1] : vector<8x32xf32> to vector<8xf32>
    %61 = vector.shape_cast %60 : vector<8xf32> to vector<8x1xf32>
    %cst_31 = arith.constant 3.200000e+01 : f32
    %62 = vector.broadcast %cst_31 : f32 to vector<8x1xf32>
    %63 = arith.divf %61, %62 : vector<8x1xf32>
    %64 = vector.broadcast %56 : vector<8x1xf32> to vector<8x32xf32>
    %65 = arith.subf %52, %64 : vector<8x32xf32>
    %cst_32 = arith.constant 9.99999974E-6 : f32
    %66 = vector.broadcast %cst_32 : f32 to vector<8x1xf32>
    %67 = arith.addf %63, %66 : vector<8x1xf32>
    %68 = math.rsqrt %67 : vector<8x1xf32>
    %69 = vector.broadcast %68 : vector<8x1xf32> to vector<8x32xf32>
    %70 = arith.mulf %65, %69 : vector<8x32xf32>
    %c0_33 = arith.constant 0 : index
    %c0_34 = arith.constant 0 : index
    %71 = vector.load %arg13[%c0_33, %c0_34] : memref<8x32xf32, #tpu.memory_space<vmem>>, vector<8x32xf32>
    tpu.vector_store %arg13[%c0_33, %c0_34], %70 {strides = array<i32>} : memref<8x32xf32, #tpu.memory_space<vmem>>, vector<8x32xf32>,
    %c0_35 = arith.constant 0 : index
    %c0_36 = arith.constant 0 : index
    %72 = vector.load %arg10[%c0_35, %c0_36] : memref<1x32xf32, #tpu.memory_space<vmem>>, vector<1x32xf32>
    %73 = vector.broadcast %72 : vector<1x32xf32> to vector<8x32xf32>
    %74 = arith.mulf %70, %73 : vector<8x32xf32>
    %cst_37 = arith.constant dense<0.000000e+00> : vector<8xf32>
    %75 = vector.multi_reduction <add>, %74, %cst_37 [1] : vector<8x32xf32> to vector<8xf32>
    %76 = vector.shape_cast %75 : vector<8xf32> to vector<8x1xf32>
    %c0_38 = arith.constant 0 : index
    %c0_39 = arith.constant 0 : index
    %77 = vector.load %arg11[%c0_38, %c0_39] : memref<1x1xf32, #tpu.memory_space<vmem>>, vector<1x1xf32>
    %78 = vector.broadcast %77 : vector<1x1xf32> to vector<8x1xf32>
    %79 = arith.addf %76, %78 : vector<8x1xf32>
    %c0_40 = arith.constant 0 : index
    %c0_41 = arith.constant 0 : index
    %80 = vector.load %arg12[%c0_40, %c0_41] : memref<8x1xf32, #tpu.memory_space<vmem>>, vector<8x1xf32>
    tpu.vector_store %arg12[%c0_40, %c0_41], %79 {strides = array<i32>} : memref<8x1xf32, #tpu.memory_space<vmem>>, vector<8x1xf32>,
    return
  }
  func.func @transform_0(%arg0: i32) -> (i32, i32) {
    %c0_i32 = arith.constant 0 : i32
    %c0_i32_0 = arith.constant 0 : i32
    return %arg0, %c0_i32 : i32, i32
  }
  func.func @transform_1(%arg0: i32) -> (i32, i32) {
    %c0_i32 = arith.constant 0 : i32
    %c0_i32_0 = arith.constant 0 : i32
    return %arg0, %c0_i32 : i32, i32
  }
  func.func @transform_2(%arg0: i32) -> (i32, i32) {
    %c0_i32 = arith.constant 0 : i32
    %c0_i32_0 = arith.constant 0 : i32
    %c0_i32_1 = arith.constant 0 : i32
    return %c0_i32, %c0_i32_0 : i32, i32
  }
  func.func @transform_3(%arg0: i32) -> (i32, i32) {
    %c0_i32 = arith.constant 0 : i32
    %c0_i32_0 = arith.constant 0 : i32
    %c0_i32_1 = arith.constant 0 : i32
    return %c0_i32, %c0_i32_0 : i32, i32
  }
  func.func @transform_4(%arg0: i32) -> (i32, i32) {
    %c0_i32 = arith.constant 0 : i32
    %c0_i32_0 = arith.constant 0 : i32
    %c0_i32_1 = arith.constant 0 : i32
    return %c0_i32, %c0_i32_0 : i32, i32
  }
  func.func @transform_5(%arg0: i32) -> (i32, i32) {
    %c0_i32 = arith.constant 0 : i32
    %c0_i32_0 = arith.constant 0 : i32
    %c0_i32_1 = arith.constant 0 : i32
    return %c0_i32, %c0_i32_0 : i32, i32
  }
  func.func @transform_6(%arg0: i32) -> (i32, i32) {
    %c0_i32 = arith.constant 0 : i32
    %c0_i32_0 = arith.constant 0 : i32
    %c0_i32_1 = arith.constant 0 : i32
    return %c0_i32, %c0_i32_0 : i32, i32
  }
  func.func @transform_7(%arg0: i32) -> (i32, i32) {
    %c0_i32 = arith.constant 0 : i32
    %c0_i32_0 = arith.constant 0 : i32
    %c0_i32_1 = arith.constant 0 : i32
    return %c0_i32, %c0_i32_0 : i32, i32
  }
  func.func @transform_8(%arg0: i32) -> (i32, i32) {
    %c0_i32 = arith.constant 0 : i32
    %c0_i32_0 = arith.constant 0 : i32
    %c0_i32_1 = arith.constant 0 : i32
    return %c0_i32, %c0_i32_0 : i32, i32
  }
  func.func @transform_9(%arg0: i32) -> (i32, i32) {
    %c0_i32 = arith.constant 0 : i32
    %c0_i32_0 = arith.constant 0 : i32
    %c0_i32_1 = arith.constant 0 : i32
    return %c0_i32, %c0_i32_0 : i32, i32
  }
  func.func @transform_10(%arg0: i32) -> (i32, i32) {
    %c0_i32 = arith.constant 0 : i32
    %c0_i32_0 = arith.constant 0 : i32
    %c0_i32_1 = arith.constant 0 : i32
    return %c0_i32, %c0_i32_0 : i32, i32
  }
  func.func @transform_11(%arg0: i32) -> (i32, i32) {
    %c0_i32 = arith.constant 0 : i32
    %c0_i32_0 = arith.constant 0 : i32
    return %arg0, %c0_i32 : i32, i32
  }
  func.func @transform_12(%arg0: i32) -> (i32, i32) {
    %c0_i32 = arith.constant 0 : i32
    %c0_i32_0 = arith.constant 0 : i32
    return %arg0, %c0_i32 : i32, i32
  }
}

</mosaic_0001>

<llo_original>
// kernel: tpu_custom_call.1
$region0: #{tpu_custom_call.1}
  #allocation0 [shape = 'u32[]', space=smem, size = 0x4, offset = 0x4, fixed_abs, tag = 'smem constant byte address 0x4 - core index']
  #allocation1 [shape = 'u32[144,128]{1,0:T(1,128)}', space=vmem, size = 0x12000, scoped, tag = 'internal scratch']
  #allocation2 [shape = 'f32[1,1]{1,0:T(1,128)S(1)}', space=vmem, size = 0x200, scoped, tag = 'scoped memory for tpu_custom_call.1']
  %s0 = inlined_call_operand.hbm [shape: f32[8,16], index: 0, kind: input, shape index: {}]
  %s1 = inlined_call_operand.hbm [shape: f32[8,32], index: 1, kind: input, shape index: {}]
  %s2 = inlined_call_operand.hbm [shape: bf16[16,32], index: 2, kind: input, shape index: {}]
  %s3 = inlined_call_operand.vmem [shape: f32[1,32], index: 3, kind: input, shape index: {}]
  %s4 = inlined_call_operand.vmem [shape: bf16[32,32], index: 4, kind: input, shape index: {}]
  %s5 = inlined_call_operand.vmem [shape: f32[1,32], index: 5, kind: input, shape index: {}]
  %s6 = inlined_call_operand.hbm [shape: bf16[64,96], index: 6, kind: input, shape index: {}]
  %s7 = inlined_call_operand.hbm [shape: f32[1,96], index: 7, kind: input, shape index: {}]
  %s8 = inlined_call_operand.vmem [shape: bf16[32,32], index: 8, kind: input, shape index: {}]
  %s9 = inlined_call_operand.vmem [shape: f32[1,32], index: 9, kind: input, shape index: {}]
  %s10 = inlined_call_operand.<no memory space> [shape: f32[1,1], index: 10, kind: input, shape index: {}]
  %s11 = inlined_call_operand.vmem [shape: f32[8,1], index: 11, kind: output, shape index: {0}]
  %s12 = inlined_call_operand.hbm [shape: f32[8,32], index: 12, kind: output, shape index: {1}]
  %13 = xla_tuple %s11, %s12
  %s14 = sld [smem:[#allocation0]]
  $region82: #{tpu_custom_call.1} parent=0
    _
  %s16 = ssub.s32 1, %s14
  %s17 = scalar_select 0, %s16, %s14
  %v18 = vstv %s10
  %19 = vst [vmem:[#allocation2] sm:$0x1] %v18
  $region1: #{tpu_custom_call.1} parent=0
    #allocation3 [shape = 'u8[4096]{0}', space=vmem, size = 0x1000, scoped, tag = 'input window, operand 0, single buffered']
    #allocation4 [shape = 's32[1]{0}', space=sflag, size = 0x4, scoped, tag = 'scoped memory for tpu_custom_call.1']
    #allocation5 [shape = 's32[1]{0}', space=sflag, size = 0x4, scoped, tag = 'scoped memory for tpu_custom_call.1']
    #allocation6 [shape = 'u8[4096]{0}', space=vmem, size = 0x1000, scoped, tag = 'input window, operand 1, single buffered']
    #allocation7 [shape = 's32[1]{0}', space=sflag, size = 0x4, scoped, tag = 'scoped memory for tpu_custom_call.1']
    #allocation8 [shape = 'u8[4096]{0}', space=vmem, size = 0x1000, scoped, tag = 'input window, operand 2, single buffered']
    #allocation9 [shape = 'u8[16384]{0}', space=vmem, size = 0x4000, scoped, tag = 'input window, operand 6, single buffered']
    #allocation10 [shape = 's32[1]{0}', space=sflag, size = 0x4, scoped, tag = 'scoped memory for tpu_custom_call.1']
    #allocation11 [shape = 'u8[512]{0}', space=vmem, size = 0x400, scoped, tag = 'input window, operand 7, single buffered']
    #allocation12 [shape = 'u8[4096]{0}', space=vmem, size = 0x1000, scoped, tag = 'output window, operand 1, single buffered']
    %20 = vsyncpa [#allocation4], 0
    %21 = vsyncpa [#allocation7], 0
    %22 = vsyncpa [#allocation10], 0
    %23 = vsyncpa [#allocation5], 0
    // Predicated region
    $region2: #{tpu_custom_call.1} parent=1 // pred_check
      _
    $region3: #{tpu_custom_call.1} parent=1 // pred_check_branch
      %25 = sbr.rel (0) target = $region5
    $region4: #{tpu_custom_call.1} parent=1 // pred_region
      %s27 = ssub.s32 128, 128
      %28 = vsyncadd [#allocation4], %s27
      %s30 = sshll.u32 [#allocation3], 4
      %s31 = int_to_ptr.vmem [resolvable:$true] %s30
      %33 = dma.hbm_to_vmem [thread:$0]  %s0, 128, %s31, [#allocation4]
    $region5: #{tpu_custom_call.1} parent=1 // pred_fallthru
      _
    // Predicated region
    $region6: #{tpu_custom_call.1} parent=1 // pred_check
      _
    $region7: #{tpu_custom_call.1} parent=1 // pred_check_branch
      %35 = sbr.rel (0) target = $region9
    $region8: #{tpu_custom_call.1} parent=1 // pred_region
      %s37 = ssub.s32 128, 128
      %38 = vsyncadd [#allocation7], %s37
      %s40 = sshll.u32 [#allocation6], 4
      %s41 = int_to_ptr.vmem [resolvable:$true] %s40
      %43 = dma.hbm_to_vmem [thread:$0]  %s1, 128, %s41, [#allocation7]
    $region9: #{tpu_custom_call.1} parent=1 // pred_fallthru
      _
    // Predicated region
    $region10: #{tpu_custom_call.1} parent=1 // pred_check
      _
    $region11: #{tpu_custom_call.1} parent=1 // pred_check_branch
      %45 = sbr.rel (0) target = $region13
    $region12: #{tpu_custom_call.1} parent=1 // pred_region
      %s47 = ssub.s32 128, 128
      %48 = vsyncadd [#allocation7], %s47
      %s49 = sshll.u32 [#allocation8], 4
      %s50 = int_to_ptr.vmem [resolvable:$true] %s49
      %55 = dma.hbm_to_vmem [thread:$0]  %s2, 128, %s50, [#allocation7], 64, 64, 4
    $region13: #{tpu_custom_call.1} parent=1 // pred_fallthru
      _
    // Predicated region
    $region14: #{tpu_custom_call.1} parent=1 // pred_check
      _
    $region15: #{tpu_custom_call.1} parent=1 // pred_check_branch
      %57 = sbr.rel (0) target = $region17
    $region16: #{tpu_custom_call.1} parent=1 // pred_region
      _
    $region17: #{tpu_custom_call.1} parent=1 // pred_fallthru
      _
    // Predicated region
    $region18: #{tpu_custom_call.1} parent=1 // pred_check
      _
    $region19: #{tpu_custom_call.1} parent=1 // pred_check_branch
      %59 = sbr.rel (0) target = $region21
    $region20: #{tpu_custom_call.1} parent=1 // pred_region
      _
    $region21: #{tpu_custom_call.1} parent=1 // pred_fallthru
      _
    // Predicated region
    $region22: #{tpu_custom_call.1} parent=1 // pred_check
      _
    $region23: #{tpu_custom_call.1} parent=1 // pred_check_branch
      %61 = sbr.rel (0) target = $region25
    $region24: #{tpu_custom_call.1} parent=1 // pred_region
      _
    $region25: #{tpu_custom_call.1} parent=1 // pred_fallthru
      _
    // Predicated region
    $region26: #{tpu_custom_call.1} parent=1 // pred_check
      _
    $region27: #{tpu_custom_call.1} parent=1 // pred_check_branch
      %63 = sbr.rel (0) target = $region29
    $region28: #{tpu_custom_call.1} parent=1 // pred_region
      %s65 = ssub.s32 512, 512
      %66 = vsyncadd [#allocation10], %s65
      %s67 = sshll.u32 [#allocation9], 4
      %s68 = int_to_ptr.vmem [resolvable:$true] %s67
      %73 = dma.hbm_to_vmem [thread:$0]  %s6, 512, %s68, [#allocation10], 64, 64, 4
    $region29: #{tpu_custom_call.1} parent=1 // pred_fallthru
      _
    // Predicated region
    $region30: #{tpu_custom_call.1} parent=1 // pred_check
      _
    $region31: #{tpu_custom_call.1} parent=1 // pred_check_branch
      %75 = sbr.rel (0) target = $region33
    $region32: #{tpu_custom_call.1} parent=1 // pred_region
      %s77 = ssub.s32 16, 16
      %78 = vsyncadd [#allocation10], %s77
      %s80 = sshll.u32 [#allocation11], 4
      %s81 = int_to_ptr.vmem [resolvable:$true] %s80
      %83 = dma.hbm_to_vmem [thread:$0]  %s7, 16, %s81, [#allocation10]
    $region33: #{tpu_custom_call.1} parent=1 // pred_fallthru
      _
    // Predicated region
    $region34: #{tpu_custom_call.1} parent=1 // pred_check
      _
    $region35: #{tpu_custom_call.1} parent=1 // pred_check_branch
      %85 = sbr.rel (0) target = $region37
    $region36: #{tpu_custom_call.1} parent=1 // pred_region
      _
    $region37: #{tpu_custom_call.1} parent=1 // pred_fallthru
      _
    // Predicated region
    $region38: #{tpu_custom_call.1} parent=1 // pred_check
      _
    $region39: #{tpu_custom_call.1} parent=1 // pred_check_branch
      %87 = sbr.rel (0) target = $region41
    $region40: #{tpu_custom_call.1} parent=1 // pred_region
      _
    $region41: #{tpu_custom_call.1} parent=1 // pred_fallthru
      _
    // Predicated region
    $region42: #{tpu_custom_call.1} parent=1 // pred_check
      _
    $region43: #{tpu_custom_call.1} parent=1 // pred_check_branch
      %89 = sbr.rel (0) target = $region45
    $region44: #{tpu_custom_call.1} parent=1 // pred_region
      _
    $region45: #{tpu_custom_call.1} parent=1 // pred_fallthru
      _
    // Predicated region
    $region46: #{tpu_custom_call.1} parent=1 // pred_check
      _
    $region47: #{tpu_custom_call.1} parent=1 // pred_check_branch
      %91 = sbr.rel (0) target = $region49
    $region48: #{tpu_custom_call.1} parent=1 // pred_region
      %92 = dma.done [#allocation4], 128
    $region49: #{tpu_custom_call.1} parent=1 // pred_fallthru
      _
    // Predicated region
    $region50: #{tpu_custom_call.1} parent=1 // pred_check
      _
    $region51: #{tpu_custom_call.1} parent=1 // pred_check_branch
      %94 = sbr.rel (0) target = $region53
    $region52: #{tpu_custom_call.1} parent=1 // pred_region
      %95 = dma.done [#allocation7], 128
    $region53: #{tpu_custom_call.1} parent=1 // pred_fallthru
      _
    // Predicated region
    $region54: #{tpu_custom_call.1} parent=1 // pred_check
      _
    $region55: #{tpu_custom_call.1} parent=1 // pred_check_branch
      %97 = sbr.rel (0) target = $region57
    $region56: #{tpu_custom_call.1} parent=1 // pred_region
      %98 = dma.done [#allocation7], 128
    $region57: #{tpu_custom_call.1} parent=1 // pred_fallthru
      _
    // Predicated region
    $region58: #{tpu_custom_call.1} parent=1 // pred_check
      _
    $region59: #{tpu_custom_call.1} parent=1 // pred_check_branch
      %100 = sbr.rel (0) target = $region61
    $region60: #{tpu_custom_call.1} parent=1 // pred_region
      %101 = dma.done [#allocation10], 512
    $region61: #{tpu_custom_call.1} parent=1 // pred_fallthru
      _
    // Predicated region
    $region62: #{tpu_custom_call.1} parent=1 // pred_check
      _
    $region63: #{tpu_custom_call.1} parent=1 // pred_check_branch
      %103 = sbr.rel (0) target = $region65
    $region64: #{tpu_custom_call.1} parent=1 // pred_region
      %104 = dma.done [#allocation10], 16
    $region65: #{tpu_custom_call.1} parent=1 // pred_fallthru
      _
    %v106 = vld [vmem:[#allocation3] sm:$0xff]
    %v107 = vld [vmem:[#allocation6] sm:$0xff]
    %v108 = vmul.f32 %v106, 0.999995
    %v109 = vpack.c.bf16 %v108, %v108
    %v110 = vld [vmem:[#allocation8] sm:$0xf]
    %v111 = vld [vmem:[#allocation8 + $0x4] sm:$0xf]
    %v112 = vld [vmem:[%s3] sm:$0x1]
    %v114 = vlaneseq
    %v115 = vshrl.u32 %v114, 7
    %v116 = vsub.s32 0, %v115
    %v117 = vrot.slane %v112, %v116
    %v121 = vunpack.c.l.b16 %v110
    %v122 = vunpack.c.l.b16 %v111
    %v123 = vpack.c.b16 %v122, %v121
    %vm125 = vcmask 130048
    %v127 = vsel %vm125, %v109, 0
    %129 = vmatprep.subr.bf16.mxu0 0
    %130 = vmatpush1.bf16.msra.mxu0 %v123
    %131 = vmatprep.subr.bf16.mxu0 0
    %132 = vmatpush1.bf16.msra.mxu0 0
    %133 = vmatprep.subr.bf16.mxu0 0
    %134 = vmatpush1.bf16.msra.mxu0 0
    %135 = vmatprep.subr.bf16.mxu0 0
    %136 = vmatpush1.bf16.msra.mxu0 0
    %137 = vmatprep.subr.bf16.mxu0 0
    %138 = vmatpush1.bf16.msra.mxu0 0
    %139 = vmatprep.subr.bf16.mxu0 0
    %140 = vmatpush1.bf16.msra.mxu0 0
    %141 = vmatprep.subr.bf16.mxu0 0
    %142 = vmatpush1.bf16.msra.mxu0 0
    %143 = vmatprep.subr.bf16.mxu0 0
    %144 = vmatpush1.bf16.msra.mxu0 0
    %145 = vmatprep.subr.bf16.mxu0 0
    %146 = vmatpush1.bf16.msra.mxu0 0
    %147 = vmatprep.subr.bf16.mxu0 0
    %148 = vmatpush1.bf16.msra.mxu0 0
    %149 = vmatprep.subr.bf16.mxu0 0
    %150 = vmatpush1.bf16.msra.mxu0 0
    %151 = vmatprep.subr.bf16.mxu0 0
    %152 = vmatpush1.bf16.msra.mxu0 0
    %153 = vmatprep.subr.bf16.mxu0 0
    %154 = vmatpush1.bf16.msra.mxu0 0
    %155 = vmatprep.subr.bf16.mxu0 0
    %156 = vmatpush1.bf16.msra.mxu0 0
    %157 = vmatprep.subr.bf16.mxu0 0
    %158 = vmatpush1.bf16.msra.mxu0 0
    %159 = vmatprep.subr.bf16.mxu0 0
    %160 = vmatpush1.bf16.msra.mxu0 0
    %161 = vmatprep.mubr.bf16.mxu0 0
    %162 = vmatmul.mubr.bf16.gmra.mrb[0].mxu0 %v127
    %v163 = vpop.f32.mrb[0].mxu0
    %v164 = vadd.f32 %v117, %v163
    %v165 = vpop.f32.mrb[0].mxu0
    %v166 = vpop.f32.mrb[0].mxu0
    %v167 = vpop.f32.mrb[0].mxu0
    %168 = vdwg.mxu0
    %v169 = vmax.f32 %v164, 0.0
    %v170 = vmul.f32 %v169, 0.99999
    %v171 = vpack.c.bf16 %v170, %v170
    %v172 = vld [vmem:[%s4] sm:$0xf]
    %v173 = vld [vmem:[%s4 + $0x4] sm:$0xf]
    %v174 = vld [vmem:[%s4 + $0x8] sm:$0xf]
    %v175 = vld [vmem:[%s4 + $0xc] sm:$0xf]
    %v176 = vld [vmem:[%s5] sm:$0x1]
    %v178 = vlaneseq
    %v179 = vshrl.u32 %v178, 7
    %v180 = vsub.s32 0, %v179
    %v181 = vrot.slane %v176, %v180
    %v187 = vunpack.c.l.b16 %v172
    %v188 = vunpack.c.l.b16 %v173
    %v189 = vunpack.c.l.b16 %v174
    %v190 = vunpack.c.l.b16 %v175
    %v191 = vpack.c.b16 %v188, %v187
    %v192 = vpack.c.b16 %v190, %v189
    %vm195 = vcmask 261120
    %v197 = vsel %vm195, %v171, 0
    %199 = vmatprep.subr.bf16.mxu0 0
    %200 = vmatpush1.bf16.msra.mxu0 %v191
    %201 = vmatprep.subr.bf16.mxu0 0
    %202 = vmatpush1.bf16.msra.mxu0 %v192
    %203 = vmatprep.subr.bf16.mxu0 0
    %204 = vmatpush1.bf16.msra.mxu0 0
    %205 = vmatprep.subr.bf16.mxu0 0
    %206 = vmatpush1.bf16.msra.mxu0 0
    %207 = vmatprep.subr.bf16.mxu0 0
    %208 = vmatpush1.bf16.msra.mxu0 0
    %209 = vmatprep.subr.bf16.mxu0 0
    %210 = vmatpush1.bf16.msra.mxu0 0
    %211 = vmatprep.subr.bf16.mxu0 0
    %212 = vmatpush1.bf16.msra.mxu0 0
    %213 = vmatprep.subr.bf16.mxu0 0
    %214 = vmatpush1.bf16.msra.mxu0 0
    %215 = vmatprep.subr.bf16.mxu0 0
    %216 = vmatpush1.bf16.msra.mxu0 0
    %217 = vmatprep.subr.bf16.mxu0 0
    %218 = vmatpush1.bf16.msra.mxu0 0
    %219 = vmatprep.subr.bf16.mxu0 0
    %220 = vmatpush1.bf16.msra.mxu0 0
    %221 = vmatprep.subr.bf16.mxu0 0
    %222 = vmatpush1.bf16.msra.mxu0 0
    %223 = vmatprep.subr.bf16.mxu0 0
    %224 = vmatpush1.bf16.msra.mxu0 0
    %225 = vmatprep.subr.bf16.mxu0 0
    %226 = vmatpush1.bf16.msra.mxu0 0
    %227 = vmatprep.subr.bf16.mxu0 0
    %228 = vmatpush1.bf16.msra.mxu0 0
    %229 = vmatprep.subr.bf16.mxu0 0
    %230 = vmatpush1.bf16.msra.mxu0 0
    %231 = vmatprep.mubr.bf16.mxu0 0
    %232 = vmatmul.mubr.bf16.gmra.mrb[0].mxu0 %v197
    %v233 = vpop.f32.mrb[0].mxu0
    %v234 = vadd.f32 %v181, %v233
    %v235 = vpop.f32.mrb[0].mxu0
    %v236 = vpop.f32.mrb[0].mxu0
    %v237 = vpop.f32.mrb[0].mxu0
    %238 = vdwg.mxu0
    %v239 = vmax.f32 %v234, 0.0
    %v240 = vmul.f32 %v107, 0.999995
    %v241 = vmul.f32 %v239, 0.99999
    %243 = vrot.lane.b32.xlu0 %v240, 32
    %v244 = vpop.permute.xlu0 %243
    %v246 = vsel %vm195, %v241, %v244
    %v247 = vpack.c.bf16 %v246, %v246
    %v248 = vld [vmem:[#allocation9] sm:$0xf]
    %v249 = vld [vmem:[#allocation9 + $0x4] sm:$0xf]
    %v250 = vld [vmem:[#allocation9 + $0x8] sm:$0xf]
    %v251 = vld [vmem:[#allocation9 + $0xc] sm:$0xf]
    %v252 = vld [vmem:[#allocation9 + $0x10] sm:$0xf]
    %v253 = vld [vmem:[#allocation9 + $0x14] sm:$0xf]
    %v254 = vld [vmem:[#allocation9 + $0x18] sm:$0xf]
    %v255 = vld [vmem:[#allocation9 + $0x1c] sm:$0xf]
    %v256 = vld [vmem:[#allocation11] sm:$0x1]
    %v258 = vlaneseq
    %v259 = vshrl.u32 %v258, 7
    %v260 = vsub.s32 0, %v259
    %v261 = vrot.slane %v256, %v260
    %v271 = vunpack.c.l.b16 %v248
    %v272 = vunpack.c.l.b16 %v249
    %v273 = vunpack.c.l.b16 %v250
    %v274 = vunpack.c.l.b16 %v251
    %v275 = vunpack.c.l.b16 %v252
    %v276 = vunpack.c.l.b16 %v253
    %v277 = vunpack.c.l.b16 %v254
    %v278 = vunpack.c.l.b16 %v255
    %v279 = vpack.c.b16 %v272, %v271
    %v280 = vpack.c.b16 %v274, %v273
    %v281 = vpack.c.b16 %v276, %v275
    %v282 = vpack.c.b16 %v278, %v277
    %vm287 = vcmask 523264
    %v289 = vsel %vm287, %v247, 0
    %291 = vmatprep.subr.bf16.mxu0 0
    %292 = vmatpush1.bf16.msra.mxu0 %v279
    %293 = vmatprep.subr.bf16.mxu0 0
    %294 = vmatpush1.bf16.msra.mxu0 %v280
    %295 = vmatprep.subr.bf16.mxu0 0
    %296 = vmatpush1.bf16.msra.mxu0 %v281
    %297 = vmatprep.subr.bf16.mxu0 0
    %298 = vmatpush1.bf16.msra.mxu0 %v282
    %299 = vmatprep.subr.bf16.mxu0 0
    %300 = vmatpush1.bf16.msra.mxu0 0
    %301 = vmatprep.subr.bf16.mxu0 0
    %302 = vmatpush1.bf16.msra.mxu0 0
    %303 = vmatprep.subr.bf16.mxu0 0
    %304 = vmatpush1.bf16.msra.mxu0 0
    %305 = vmatprep.subr.bf16.mxu0 0
    %306 = vmatpush1.bf16.msra.mxu0 0
    %307 = vmatprep.subr.bf16.mxu0 0
    %308 = vmatpush1.bf16.msra.mxu0 0
    %309 = vmatprep.subr.bf16.mxu0 0
    %310 = vmatpush1.bf16.msra.mxu0 0
    %311 = vmatprep.subr.bf16.mxu0 0
    %312 = vmatpush1.bf16.msra.mxu0 0
    %313 = vmatprep.subr.bf16.mxu0 0
    %314 = vmatpush1.bf16.msra.mxu0 0
    %315 = vmatprep.subr.bf16.mxu0 0
    %316 = vmatpush1.bf16.msra.mxu0 0
    %317 = vmatprep.subr.bf16.mxu0 0
    %318 = vmatpush1.bf16.msra.mxu0 0
    %319 = vmatprep.subr.bf16.mxu0 0
    %320 = vmatpush1.bf16.msra.mxu0 0
    %321 = vmatprep.subr.bf16.mxu0 0
    %322 = vmatpush1.bf16.msra.mxu0 0
    %323 = vmatprep.mubr.bf16.mxu0 0
    %324 = vmatmul.mubr.bf16.gmra.mrb[0].mxu0 %v289
    %v325 = vpop.f32.mrb[0].mxu0
    %v326 = vadd.f32 %v261, %v325
    %v327 = vpop.f32.mrb[0].mxu0
    %v328 = vpop.f32.mrb[0].mxu0
    %v329 = vpop.f32.mrb[0].mxu0
    %330 = vdwg.mxu0
    %v331 = vxor.u32 %v326, 2147483648
    %v332 = vmul.f32 %v331, 1.442695
    %v333 = vpow.pop %v332
    %v334 = vadd.f32 %v333, 1.0
    %v335 = vrcp.pop %v334
    %v336 = vmul.f32 1.0, %v335
    %v337 = vmul.f32 %v336, %v244
    %v338 = vpack.c.bf16 %v337, %v337
    %v339 = vld [vmem:[%s8] sm:$0xf]
    %v340 = vld [vmem:[%s8 + $0x4] sm:$0xf]
    %v341 = vld [vmem:[%s8 + $0x8] sm:$0xf]
    %v342 = vld [vmem:[%s8 + $0xc] sm:$0xf]
    %344 = vrot.lane.b32.xlu0 %v338, 96
    %v345 = vpop.permute.xlu0 %344
    %v350 = vunpack.c.l.b16 %v339
    %v351 = vunpack.c.l.b16 %v340
    %v352 = vunpack.c.l.b16 %v341
    %v353 = vunpack.c.l.b16 %v342
    %v354 = vpack.c.b16 %v351, %v350
    %v355 = vpack.c.b16 %v353, %v352
    %v359 = vsel %vm195, %v345, 0
    %361 = vmatprep.subr.bf16.mxu0 0
    %362 = vmatpush1.bf16.msra.mxu0 %v354
    %363 = vmatprep.subr.bf16.mxu0 0
    %364 = vmatpush1.bf16.msra.mxu0 %v355
    %365 = vmatprep.subr.bf16.mxu0 0
    %366 = vmatpush1.bf16.msra.mxu0 0
    %367 = vmatprep.subr.bf16.mxu0 0
    %368 = vmatpush1.bf16.msra.mxu0 0
    %369 = vmatprep.subr.bf16.mxu0 0
    %370 = vmatpush1.bf16.msra.mxu0 0
    %371 = vmatprep.subr.bf16.mxu0 0
    %372 = vmatpush1.bf16.msra.mxu0 0
    %373 = vmatprep.subr.bf16.mxu0 0
    %374 = vmatpush1.bf16.msra.mxu0 0
    %375 = vmatprep.subr.bf16.mxu0 0
    %376 = vmatpush1.bf16.msra.mxu0 0
    %377 = vmatprep.subr.bf16.mxu0 0
    %378 = vmatpush1.bf16.msra.mxu0 0
    %379 = vmatprep.subr.bf16.mxu0 0
    %380 = vmatpush1.bf16.msra.mxu0 0
    %381 = vmatprep.subr.bf16.mxu0 0
    %382 = vmatpush1.bf16.msra.mxu0 0
    %383 = vmatprep.subr.bf16.mxu0 0
    %384 = vmatpush1.bf16.msra.mxu0 0
    %385 = vmatprep.subr.bf16.mxu0 0
    %386 = vmatpush1.bf16.msra.mxu0 0
    %387 = vmatprep.subr.bf16.mxu0 0
    %388 = vmatpush1.bf16.msra.mxu0 0
    %389 = vmatprep.subr.bf16.mxu0 0
    %390 = vmatpush1.bf16.msra.mxu0 0
    %391 = vmatprep.subr.bf16.mxu0 0
    %392 = vmatpush1.bf16.msra.mxu0 0
    %393 = vmatprep.mubr.bf16.mxu0 0
    %394 = vmatmul.mubr.bf16.gmra.mrb[0].mxu0 %v359
    %v395 = vpop.f32.mrb[0].mxu0
    %v396 = vadd.f32 0.0, %v395
    %v397 = vpop.f32.mrb[0].mxu0
    %v398 = vpop.f32.mrb[0].mxu0
    %v399 = vpop.f32.mrb[0].mxu0
    %400 = vdwg.mxu0
    %402 = vrot.lane.b32.xlu0 %v396, 64
    %v403 = vpop.permute.xlu0 %402
    %v405 = vadd.f32 %v326, %v403
    %v406 = vtanh.pop %v405
    %v407 = vsub.f32 1.0, %v336
    %v408 = vmul.f32 %v407, %v107
    %410 = vrot.lane.b32.xlu0 %v406, 64
    %v411 = vpop.permute.xlu0 %410
    %v413 = vmul.f32 %v336, %v411
    %v414 = vadd.f32 %v408, %v413
    %v415 = vsel %vm195, %v414, 0.0
    %416 = vadd.xlane.f32.xlu0 %v415
    %v417 = vpop.xlane.xlu0 %416
    %v418 = vrcp.pop 32.0
    %v419 = vmul.f32 %v417, %v418
    %v420 = vsub.f32 %v414, %v419
    %v421 = vmul.f32 %v420, %v420
    %v422 = vsel %vm195, %v421, 0.0
    %423 = vadd.xlane.f32.xlu0 %v422
    %v424 = vpop.xlane.xlu0 %423
    %v425 = vmul.f32 %v424, %v418
    %v426 = vadd.f32 %v425, 1e-05
    %v427 = vrsqrt.pop %v426
    %v428 = vmul.f32 %v420, %v427
    %429 = vst.msk [vmem:[#allocation12] sm:$0xff] %vm195, %v428
    %v430 = vld [vmem:[%s9] sm:$0x1]
    %v432 = vlaneseq
    %v433 = vshrl.u32 %v432, 7
    %v434 = vsub.s32 0, %v433
    %v435 = vrot.slane %v430, %v434
    %v437 = vmul.f32 %v428, %v435
    %v438 = vsel %vm195, %v437, 0.0
    %439 = vadd.xlane.f32.xlu0 %v438
    %v440 = vpop.xlane.xlu0 %439
    %v441 = vld [vmem:[#allocation2] sm:$0x1]
    %v443 = vlaneseq
    %v444 = vshrl.u32 %v443, 7
    %v445 = vsub.s32 0, %v444
    %v446 = vrot.slane %v441, %v445
    %v448 = vadd.f32 %v440, %v446
    %vm449 = vcmask 7168
    %450 = vst.msk [vmem:[%s11] sm:$0xff] %vm449, %v448
    // Predicated region
    $region66: #{tpu_custom_call.1} parent=1 // pred_check
      _
    $region67: #{tpu_custom_call.1} parent=1 // pred_check_branch
      %452 = sbr.rel (0) target = $region69
    $region68: #{tpu_custom_call.1} parent=1 // pred_region
      _
    $region69: #{tpu_custom_call.1} parent=1 // pred_fallthru
      _
    // Predicated region
    $region70: #{tpu_custom_call.1} parent=1 // pred_check
      _
    $region71: #{tpu_custom_call.1} parent=1 // pred_check_branch
      %454 = sbr.rel (0) target = $region73
    $region72: #{tpu_custom_call.1} parent=1 // pred_region
      %s456 = ssub.s32 128, 128
      %457 = vsyncadd [#allocation5], %s456
      %s459 = sshll.u32 [#allocation12], 4
      %s460 = int_to_ptr.vmem [resolvable:$true] %s459
      %462 = dma.vmem_to_hbm [thread:$0]  %s460, 128, %s12, [#allocation5]
    $region73: #{tpu_custom_call.1} parent=1 // pred_fallthru
      _
    // Predicated region
    $region74: #{tpu_custom_call.1} parent=1 // pred_check
      _
    $region75: #{tpu_custom_call.1} parent=1 // pred_check_branch
      %464 = sbr.rel (0) target = $region77
    $region76: #{tpu_custom_call.1} parent=1 // pred_region
      _
    $region77: #{tpu_custom_call.1} parent=1 // pred_fallthru
      _
    // Predicated region
    $region78: #{tpu_custom_call.1} parent=1 // pred_check
      _
    $region79: #{tpu_custom_call.1} parent=1 // pred_check_branch
      %466 = sbr.rel (0) target = $region81
    $region80: #{tpu_custom_call.1} parent=1 // pred_region
      %467 = dma.done [#allocation5], 128
    $region81: #{tpu_custom_call.1} parent=1 // pred_fallthru
      _
    %468 = vsyncpa [#allocation4], 1
    %469 = vsyncpa [#allocation7], 1
    %470 = vsyncpa [#allocation10], 1
    %471 = vsyncpa [#allocation5], 1

</llo_original>
